<compile_context>
chip_gen: v5e
topology: v5e:2x2
jax: 0.10.0
libtpu: 0.0.40
codegen_flags: <defaults>
</compile_context>

<pallas_src>
import functools

import jax
import jax.numpy as jnp
import numpy as np
from jax.experimental import pallas as pl
from jax.experimental.pallas import tpu as pltpu

LN_EPS = 1e-5          # PyTorch nn.LayerNorm default eps
LEAKY_SLOPE = 0.01     # PyTorch nn.LeakyReLU default negative_slope


def _round_up(n, m):
    return ((n + m - 1) // m) * m


def _round_down(n, m):
    return (n // m) * m


# --------------------------------------------------------------------------------------
# Kernel
# --------------------------------------------------------------------------------------
def mlp_kernel(x_ref, w1_ref, b1_ref, w2_ref, b2_ref, o_ref):
    """Fused: LayerNorm (affine pre-folded into W1/b1) -> Linear1 -> LeakyReLU -> Linear2."""
    x = x_ref[...].astype(jnp.float32)                         # (TB, D_in) f32 elementwise path

    # ---- LayerNorm over last dim (two-pass moments; robust, matches PyTorch) ----
    mean = jnp.mean(x, axis=-1, keepdims=True)
    xc = x - mean
    var = jnp.mean(xc * xc, axis=-1, keepdims=True)
    xn = xc * jax.lax.rsqrt(var + LN_EPS)                      # rsqrt -> EUP slot
    # (gamma/beta folded into W1'/b1' on the wrapper side)

    # ---- Linear 1 + LeakyReLU (bf16 operands on MXU, f32 accumulate) ----
    h = jnp.dot(xn.astype(w1_ref.dtype), w1_ref[...],
                preferred_element_type=jnp.float32) + b1_ref[...]
    h = jnp.maximum(h, LEAKY_SLOPE * h)                        # LeakyReLU: 2 VALU ops

    # ---- Dropout: eval-mode identity (dropout_prob=0.0) ----

    # ---- Linear 2 + Identity out_act (lane-dense padded output columns) ----
    y = jnp.dot(h.astype(w2_ref.dtype), w2_ref[...],
                preferred_element_type=jnp.float32) + b2_ref[...]
    o_ref[...] = y.astype(o_ref.dtype)


# --------------------------------------------------------------------------------------
# One-time parameter preparation (NOT in the per-call hot path)
# --------------------------------------------------------------------------------------
def prepare_params(gamma, beta, w1, b1, w2, b2, *, use_bf16_matmul=True):
    """Fold LayerNorm affine into Linear1, pad output columns to 128 lanes, cast to bf16.

    (xn * gamma + beta) @ W1 + b1  ==  xn @ (gamma[:,None] * W1) + (beta @ W1 + b1)
    """
    gamma = gamma.reshape(-1).astype(jnp.float32)
    beta = beta.reshape(1, -1).astype(jnp.float32)
    w1 = w1.astype(jnp.float32)
    b1 = b1.reshape(1, -1).astype(jnp.float32)
    w2 = w2.astype(jnp.float32)
    b2 = b2.reshape(1, -1).astype(jnp.float32)

    w1f = gamma[:, None] * w1                     # (d_in, d_hid) row-scale
    b1f = beta @ w1 + b1                          # (1, d_hid)

    d_out = w2.shape[1]
    d_out_p = _round_up(d_out, 128)               # lane-dense output stores
    if d_out_p != d_out:
        w2 = jnp.pad(w2, ((0, 0), (0, d_out_p - d_out)))
        b2 = jnp.pad(b2, ((0, 0), (0, d_out_p - d_out)))

    if use_bf16_matmul:
        w1f = w1f.astype(jnp.bfloat16)
        w2 = w2.astype(jnp.bfloat16)

    params = (jax.block_until_ready(w1f), jax.block_until_ready(b1f),
              jax.block_until_ready(w2), jax.block_until_ready(b2))
    return params, d_out


# --------------------------------------------------------------------------------------
# Tile selection (generation-aware VMEM budget)
# --------------------------------------------------------------------------------------
def _vmem_budget_bytes():
    phys = 64 << 20                               # conservative fallback (v7x physical)
    try:
        phys = int(pltpu.get_tpu_info().vmem_capacity_bytes)
    except Exception:
        pass
    # v5e/v6e (128 MiB) -> 64 MiB budget; v7x (64 MiB) -> 32 MiB budget.
    return min(phys // 2, 64 << 20)


def _choose_tile_b(B, d_in, d_hid, d_out_p, weight_bytes):
    budget = _vmem_budget_bytes()
    # double-buffered x/out tiles (f32) + in-kernel f32 intermediates, per batch row
    per_row = (2 * (d_in + d_out_p) + (d_in + d_hid + d_out_p)) * 4
    avail = max(budget - 2 * weight_bytes, per_row * 8)
    cap = max(8, _round_down(min(1024, avail // per_row), 8))
    if B <= cap:
        # Tiny/medium batch: single grid step, no pipeline overhead (dispatch-bound regime).
        return B, budget
    # Large batch: keep >= 2 grid steps so the "parallel" batch axis can shard across
    # v7x's two TensorCores, and keep tiles within the VMEM budget for pipelining.
    tile_b = min(cap, max(8, _round_up((B + 1) // 2, 8)))
    return tile_b, budget


# --------------------------------------------------------------------------------------
# Forward
# --------------------------------------------------------------------------------------
@functools.partial(jax.jit, static_argnames=("d_out", "tile_b", "vmem_limit_bytes"))
def _mlp_forward_impl(x, w1, b1, w2, b2, *, d_out, tile_b, vmem_limit_bytes):
    B, d_in = x.shape
    d_hid = w1.shape[1]
    d_out_p = w2.shape[1]
    grid = (pl.cdiv(B, tile_b),)

    flops = 2 * B * (d_in * d_hid + d_hid * d_out_p)
    bytes_accessed = (x.size * x.dtype.itemsize
                      + B * d_out_p * 4
                      + w1.size * w1.dtype.itemsize + b1.size * b1.dtype.itemsize
                      + w2.size * w2.dtype.itemsize + b2.size * b2.dtype.itemsize)

    out = pl.pallas_call(
        mlp_kernel,
        out_shape=jax.ShapeDtypeStruct((B, d_out_p), jnp.float32),
        grid_spec=pltpu.PrefetchScalarGridSpec(
            num_scalar_prefetch=0,
            grid=grid,
            in_specs=[
                pl.BlockSpec((tile_b, d_in), lambda i: (i, 0)),     # x (batch-tiled)
                pl.BlockSpec((d_in, d_hid), lambda i: (0, 0)),      # W1' (affine-folded)
                pl.BlockSpec((1, d_hid), lambda i: (0, 0)),         # b1'
                pl.BlockSpec((d_hid, d_out_p), lambda i: (0, 0)),   # W2 (out cols padded)
                pl.BlockSpec((1, d_out_p), lambda i: (0, 0)),       # b2 (padded)
            ],
            out_specs=pl.BlockSpec((tile_b, d_out_p), lambda i: (i, 0)),
        ),
        compiler_params=pltpu.CompilerParams(
            dimension_semantics=("parallel",),
            vmem_limit_bytes=int(vmem_limit_bytes),
        ),
        cost_estimate=pl.CostEstimate(
            flops=int(flops),
            transcendentals=int(B),
            bytes_accessed=int(bytes_accessed),
        ),
    )(x, w1, b1, w2, b2)

    if d_out != d_out_p:
        out = out[:, :d_out]
    return out


def mlp_forward(x, params, d_out):
    """params = prepare_params(...) output (folded / padded / bf16 weights)."""
    w1, b1, w2, b2 = params
    B, d_in = x.shape
    d_hid = w1.shape[1]
    d_out_p = w2.shape[1]
    weight_bytes = (w1.size * w1.dtype.itemsize + b1.size * b1.dtype.itemsize
                    + w2.size * w2.dtype.itemsize + b2.size * b2.dtype.itemsize)
    tile_b, vmem_budget = _choose_tile_b(B, d_in, d_hid, d_out_p, weight_bytes)
    return _mlp_forward_impl(x, w1, b1, w2, b2,
                             d_out=d_out, tile_b=tile_b, vmem_limit_bytes=vmem_budget)


# --------------------------------------------------------------------------------------
# Pure-JAX f32 reference (PyTorch module semantics)
# --------------------------------------------------------------------------------------
def reference_forward(x, gamma, beta, w1, b1, w2, b2):
    x = x.astype(jnp.float32)
    mean = jnp.mean(x, axis=-1, keepdims=True)
    xc = x - mean
    var = jnp.mean(xc * xc, axis=-1, keepdims=True)
    xn = xc * jax.lax.rsqrt(var + LN_EPS)
    xn = xn * gamma.reshape(1, -1) + beta.reshape(1, -1)
    h = xn @ w1 + b1.reshape(1, -1)
    h = jnp.where(h >= 0.0, h, LEAKY_SLOPE * h)
    y = h @ w2 + b2.reshape(1, -1)
    return y


if __name__ == "__main__":
    # Module config: MLP(input_dim=16, output_dim=8, dropout_prob=0.0,
    #                   num_neurons=[32], hidden_act='LeakyReLU',
    #                   out_act='Identity', input_norm='layer')
    B, D_IN, D_HID, D_OUT = 16, 16, 32, 8

    key = jax.random.PRNGKey(0)
    kx, kg, kb, kw1, kb1, kw2, kb2 = jax.random.split(key, 7)

    x = jax.random.normal(kx, (B, D_IN), dtype=jnp.float32)

    # LayerNorm params (PyTorch init gamma=1, beta=0; perturbed deterministically)
    gamma = (jnp.ones((1, D_IN), jnp.float32)
             + 0.01 * jax.random.normal(kg, (1, D_IN), jnp.float32))
    beta = 0.01 * jax.random.normal(kb, (1, D_IN), jnp.float32)

    # Linear params stored as (in, out) == PyTorch weight.T ; Kaiming-uniform-ish scale.
    lim1 = 1.0 / np.sqrt(D_IN)
    w1 = jax.random.uniform(kw1, (D_IN, D_HID), jnp.float32, -lim1, lim1)
    b1 = jax.random.uniform(kb1, (1, D_HID), jnp.float32, -lim1, lim1)
    lim2 = 1.0 / np.sqrt(D_HID)
    w2 = jax.random.uniform(kw2, (D_HID, D_OUT), jnp.float32, -lim2, lim2)
    b2 = jax.random.uniform(kb2, (1, D_OUT), jnp.float32, -lim2, lim2)

    # One-time preprocessing (hoisted out of the hot path).
    params, d_out = prepare_params(gamma, beta, w1, b1, w2, b2, use_bf16_matmul=True)

    out = mlp_forward(x, params, d_out)
    out = jax.block_until_ready(out)

    ref = reference_forward(x, gamma, beta, w1, b1, w2, b2)
    # bf16 MXU operands (f32 accumulation) vs pure-f32 reference -> ~1e-2 rel tolerance.
    np.testing.assert_allclose(np.asarray(out), np.asarray(ref), rtol=3e-2, atol=3e-2)

    print("KERNEL_OK")
</pallas_src>

<mosaic_0001>
module attributes {stable_mosaic.version = 11 : i64} {
  func.func @mlp_kernel(%arg0: i32, %arg1: memref<16x16xf32, #tpu.memory_space<vmem>>, %arg2: memref<16x32xbf16, #tpu.memory_space<vmem>>, %arg3: memref<1x32xf32, #tpu.memory_space<vmem>>, %arg4: memref<32x128xbf16, #tpu.memory_space<vmem>>, %arg5: memref<1x128xf32, #tpu.memory_space<vmem>>, %arg6: memref<16x128xf32, #tpu.memory_space<vmem>>) attributes {dimension_semantics = [#tpu.dimension_semantics<parallel>], iteration_bounds = array<i64: 1>, scalar_prefetch = 0 : i64, scratch_operands = 0 : i64, tpu.core_type = #tpu.core_type<tc>, window_params = [{transform_indices = @transform_0, window_bounds = array<i64: 16, 16>}, {pipeline_mode = #tpu.pipeline_mode<synchronous>, transform_indices = @transform_1, window_bounds = array<i64: 16, 32>}, {pipeline_mode = #tpu.pipeline_mode<synchronous>, transform_indices = @transform_2, window_bounds = array<i64: 1, 32>}, {pipeline_mode = #tpu.pipeline_mode<synchronous>, transform_indices = @transform_3, window_bounds = array<i64: 32, 128>}, {pipeline_mode = #tpu.pipeline_mode<synchronous>, transform_indices = @transform_4, window_bounds = array<i64: 1, 128>}, {transform_indices = @transform_5, window_bounds = array<i64: 16, 128>}]} {
    %c0 = arith.constant 0 : index
    %c0_0 = arith.constant 0 : index
    %0 = vector.load %arg1[%c0, %c0_0] : memref<16x16xf32, #tpu.memory_space<vmem>>, vector<16x16xf32>
    %cst = arith.constant dense<0.000000e+00> : vector<16xf32>
    %1 = vector.multi_reduction <add>, %0, %cst [1] : vector<16x16xf32> to vector<16xf32>
    %2 = vector.shape_cast %1 : vector<16xf32> to vector<16x1xf32>
    %cst_1 = arith.constant 1.600000e+01 : f32
    %3 = vector.broadcast %cst_1 : f32 to vector<16x1xf32>
    %4 = arith.divf %2, %3 : vector<16x1xf32>
    %5 = vector.broadcast %4 : vector<16x1xf32> to vector<16x16xf32>
    %6 = arith.subf %0, %5 : vector<16x16xf32>
    %7 = arith.mulf %6, %6 : vector<16x16xf32>
    %cst_2 = arith.constant dense<0.000000e+00> : vector<16xf32>
    %8 = vector.multi_reduction <add>, %7, %cst_2 [1] : vector<16x16xf32> to vector<16xf32>
    %9 = vector.shape_cast %8 : vector<16xf32> to vector<16x1xf32>
    %cst_3 = arith.constant 1.600000e+01 : f32
    %10 = vector.broadcast %cst_3 : f32 to vector<16x1xf32>
    %11 = arith.divf %9, %10 : vector<16x1xf32>
    %cst_4 = arith.constant 9.99999974E-6 : f32
    %12 = vector.broadcast %cst_4 : f32 to vector<16x1xf32>
    %13 = arith.addf %11, %12 : vector<16x1xf32>
    %14 = math.rsqrt %13 : vector<16x1xf32>
    %15 = vector.broadcast %14 : vector<16x1xf32> to vector<16x16xf32>
    %16 = arith.mulf %6, %15 : vector<16x16xf32>
    %17 = arith.truncf %16 : vector<16x16xf32> to vector<16x16xbf16>
    %c0_5 = arith.constant 0 : index
    %c0_6 = arith.constant 0 : index
    %18 = vector.load %arg2[%c0_5, %c0_6] : memref<16x32xbf16, #tpu.memory_space<vmem>>, vector<16x32xbf16>
    %cst_7 = arith.constant dense<0.000000e+00> : vector<16x32xf32>
    %19 = tpu.matmul %17, %18, %cst_7 {dimension_numbers = #tpu.dot_dimension_numbers<[1], [0], [0], [1], [0, 0, 1, 1], [], []>} : vector<16x16xbf16>, vector<16x32xbf16>, vector<16x32xf32> -> vector<16x32xf32>
    %c0_8 = arith.constant 0 : index
    %c0_9 = arith.constant 0 : index
    %20 = vector.load %arg3[%c0_8, %c0_9] : memref<1x32xf32, #tpu.memory_space<vmem>>, vector<1x32xf32>
    %21 = vector.broadcast %20 : vector<1x32xf32> to vector<16x32xf32>
    %22 = arith.addf %19, %21 : vector<16x32xf32>
    %cst_10 = arith.constant 0.00999999977 : f32
    %23 = vector.broadcast %cst_10 : f32 to vector<16x32xf32>
    %24 = arith.mulf %23, %22 : vector<16x32xf32>
    %25 = arith.maximumf %22, %24 : vector<16x32xf32>
    %26 = arith.truncf %25 : vector<16x32xf32> to vector<16x32xbf16>
    %c0_11 = arith.constant 0 : index
    %c0_12 = arith.constant 0 : index
    %27 = vector.load %arg4[%c0_11, %c0_12] : memref<32x128xbf16, #tpu.memory_space<vmem>>, vector<32x128xbf16>
    %cst_13 = arith.constant dense<0.000000e+00> : vector<16x128xf32>
    %28 = tpu.matmul %26, %27, %cst_13 {dimension_numbers = #tpu.dot_dimension_numbers<[1], [0], [0], [1], [0, 0, 1, 1], [], []>} : vector<16x32xbf16>, vector<32x128xbf16>, vector<16x128xf32> -> vector<16x128xf32>
    %c0_14 = arith.constant 0 : index
    %c0_15 = arith.constant 0 : index
    %29 = vector.load %arg5[%c0_14, %c0_15] : memref<1x128xf32, #tpu.memory_space<vmem>>, vector<1x128xf32>
    %30 = vector.broadcast %29 : vector<1x128xf32> to vector<16x128xf32>
    %31 = arith.addf %28, %30 : vector<16x128xf32>
    %c0_16 = arith.constant 0 : index
    %c0_17 = arith.constant 0 : index
    %32 = vector.load %arg6[%c0_16, %c0_17] : memref<16x128xf32, #tpu.memory_space<vmem>>, vector<16x128xf32>
    tpu.vector_store %arg6[%c0_16, %c0_17], %31 {strides = array<i32>} : memref<16x128xf32, #tpu.memory_space<vmem>>, vector<16x128xf32>,
    return
  }
  func.func @transform_0(%arg0: i32) -> (i32, i32) {
    %c0_i32 = arith.constant 0 : i32
    %c0_i32_0 = arith.constant 0 : i32
    return %arg0, %c0_i32 : i32, i32
  }
  func.func @transform_1(%arg0: i32) -> (i32, i32) {
    %c0_i32 = arith.constant 0 : i32
    %c0_i32_0 = arith.constant 0 : i32
    %c0_i32_1 = arith.constant 0 : i32
    return %c0_i32, %c0_i32_0 : i32, i32
  }
  func.func @transform_2(%arg0: i32) -> (i32, i32) {
    %c0_i32 = arith.constant 0 : i32
    %c0_i32_0 = arith.constant 0 : i32
    %c0_i32_1 = arith.constant 0 : i32
    return %c0_i32, %c0_i32_0 : i32, i32
  }
  func.func @transform_3(%arg0: i32) -> (i32, i32) {
    %c0_i32 = arith.constant 0 : i32
    %c0_i32_0 = arith.constant 0 : i32
    %c0_i32_1 = arith.constant 0 : i32
    return %c0_i32, %c0_i32_0 : i32, i32
  }
  func.func @transform_4(%arg0: i32) -> (i32, i32) {
    %c0_i32 = arith.constant 0 : i32
    %c0_i32_0 = arith.constant 0 : i32
    %c0_i32_1 = arith.constant 0 : i32
    return %c0_i32, %c0_i32_0 : i32, i32
  }
  func.func @transform_5(%arg0: i32) -> (i32, i32) {
    %c0_i32 = arith.constant 0 : i32
    %c0_i32_0 = arith.constant 0 : i32
    return %arg0, %c0_i32 : i32, i32
  }
}

</mosaic_0001>

<llo_original>
// kernel: _mlp_forward_impl.1
$region0: #{_mlp_forward_impl.1}
  #allocation0 [shape = 'u32[]', space=smem, size = 0x4, offset = 0x4, fixed_abs, tag = 'smem constant byte address 0x4 - core index']
  #allocation1 [shape = 'u32[72,128]{1,0:T(1,128)}', space=vmem, size = 0x9000, scoped, tag = 'internal scratch']
  %s0 = inlined_call_operand.hbm [shape: f32[16,16], index: 0, kind: input, shape index: {}]
  %s1 = inlined_call_operand.hbm [shape: bf16[16,32], index: 1, kind: input, shape index: {}]
  %s2 = inlined_call_operand.vmem [shape: f32[1,32], index: 2, kind: input, shape index: {}]
  %s3 = inlined_call_operand.hbm [shape: bf16[32,128], index: 3, kind: input, shape index: {}]
  %s4 = inlined_call_operand.vmem [shape: f32[1,128], index: 4, kind: input, shape index: {}]
  %s5 = inlined_call_operand.vmem [shape: f32[16,128], index: 5, kind: output, shape index: {}]
  %s6 = sld [smem:[#allocation0]]
  $region42: #{_mlp_forward_impl.1} parent=0
    _
  %s8 = ssub.s32 1, %s6
  %s9 = scalar_select 0, %s8, %s6
  $region1: #{_mlp_forward_impl.1} parent=0
    #allocation2 [shape = 'u8[8192]{0}', space=vmem, size = 0x2000, scoped, tag = 'input window, operand 0, single buffered']
    #allocation3 [shape = 's32[1]{0}', space=sflag, size = 0x4, scoped, tag = 'scoped memory for _mlp_forward_impl.1']
    #allocation4 [shape = 'u8[4096]{0}', space=vmem, size = 0x1000, scoped, tag = 'input window, operand 1, single buffered']
    #allocation5 [shape = 's32[1]{0}', space=sflag, size = 0x4, scoped, tag = 'scoped memory for _mlp_forward_impl.1']
    #allocation6 [shape = 'u8[8192]{0}', space=vmem, size = 0x2000, scoped, tag = 'input window, operand 3, single buffered']
    %10 = vsyncpa [#allocation3], 0
    %11 = vsyncpa [#allocation5], 0
    // Predicated region
    $region2: #{_mlp_forward_impl.1} parent=1 // pred_check
      _
    $region3: #{_mlp_forward_impl.1} parent=1 // pred_check_branch
      %13 = sbr.rel (0) target = $region5
    $region4: #{_mlp_forward_impl.1} parent=1 // pred_region
      %15 = vsyncadd [#allocation3], 0
      %s16 = sshll.u32 %s0, 4
      %s17 = int_to_ptr.hbm [resolvable:$true] %s16
      %s18 = sshll.u32 [#allocation2], 4
      %s19 = int_to_ptr.vmem [resolvable:$true] %s18
      %24 = dma.hbm_to_vmem [thread:$0]  %s17, 256, %s19, [#allocation3], 128, 128, 8
    $region5: #{_mlp_forward_impl.1} parent=1 // pred_fallthru
      _
    // Predicated region
    $region6: #{_mlp_forward_impl.1} parent=1 // pred_check
      _
    $region7: #{_mlp_forward_impl.1} parent=1 // pred_check_branch
      %26 = sbr.rel (0) target = $region9
    $region8: #{_mlp_forward_impl.1} parent=1 // pred_region
      %28 = vsyncadd [#allocation5], 0
      %s29 = sshll.u32 %s1, 4
      %s30 = int_to_ptr.hbm [resolvable:$true] %s29
      %s31 = sshll.u32 [#allocation4], 4
      %s32 = int_to_ptr.vmem [resolvable:$true] %s31
      %37 = dma.hbm_to_vmem [thread:$0]  %s30, 128, %s32, [#allocation5], 64, 64, 4
    $region9: #{_mlp_forward_impl.1} parent=1 // pred_fallthru
      _
    // Predicated region
    $region10: #{_mlp_forward_impl.1} parent=1 // pred_check
      _
    $region11: #{_mlp_forward_impl.1} parent=1 // pred_check_branch
      %39 = sbr.rel (0) target = $region13
    $region12: #{_mlp_forward_impl.1} parent=1 // pred_region
      _
    $region13: #{_mlp_forward_impl.1} parent=1 // pred_fallthru
      _
    // Predicated region
    $region14: #{_mlp_forward_impl.1} parent=1 // pred_check
      _
    $region15: #{_mlp_forward_impl.1} parent=1 // pred_check_branch
      %41 = sbr.rel (0) target = $region17
    $region16: #{_mlp_forward_impl.1} parent=1 // pred_region
      %43 = vsyncadd [#allocation5], 0
      %s44 = sshll.u32 %s3, 4
      %s45 = int_to_ptr.hbm [resolvable:$true] %s44
      %s46 = sshll.u32 [#allocation6], 4
      %s47 = int_to_ptr.vmem [resolvable:$true] %s46
      %52 = dma.hbm_to_vmem [thread:$0]  %s45, 256, %s47, [#allocation5], 64, 64, 4
    $region17: #{_mlp_forward_impl.1} parent=1 // pred_fallthru
      _
    // Predicated region
    $region18: #{_mlp_forward_impl.1} parent=1 // pred_check
      _
    $region19: #{_mlp_forward_impl.1} parent=1 // pred_check_branch
      %54 = sbr.rel (0) target = $region21
    $region20: #{_mlp_forward_impl.1} parent=1 // pred_region
      _
    $region21: #{_mlp_forward_impl.1} parent=1 // pred_fallthru
      _
    // Predicated region
    $region22: #{_mlp_forward_impl.1} parent=1 // pred_check
      _
    $region23: #{_mlp_forward_impl.1} parent=1 // pred_check_branch
      %56 = sbr.rel (0) target = $region25
    $region24: #{_mlp_forward_impl.1} parent=1 // pred_region
      %58 = dma.done [#allocation3], 256
    $region25: #{_mlp_forward_impl.1} parent=1 // pred_fallthru
      _
    // Predicated region
    $region26: #{_mlp_forward_impl.1} parent=1 // pred_check
      _
    $region27: #{_mlp_forward_impl.1} parent=1 // pred_check_branch
      %60 = sbr.rel (0) target = $region29
    $region28: #{_mlp_forward_impl.1} parent=1 // pred_region
      %62 = dma.done [#allocation5], 128
    $region29: #{_mlp_forward_impl.1} parent=1 // pred_fallthru
      _
    // Predicated region
    $region30: #{_mlp_forward_impl.1} parent=1 // pred_check
      _
    $region31: #{_mlp_forward_impl.1} parent=1 // pred_check_branch
      %64 = sbr.rel (0) target = $region33
    $region32: #{_mlp_forward_impl.1} parent=1 // pred_region
      %66 = dma.done [#allocation5], 256
    $region33: #{_mlp_forward_impl.1} parent=1 // pred_fallthru
      _
    %v68 = vld [vmem:[#allocation2] sm:$0xff]
    %v69 = vld [vmem:[#allocation2 + $0x8] sm:$0xff]
    %vm70 = vcmask 130048
    %v71 = vsel %vm70, %v68, 0.0
    %72 = vadd.xlane.f32.xlu0 %v71
    %v73 = vpop.xlane.xlu0 %72
    %v74 = vsel %vm70, %v69, 0.0
    %75 = vadd.xlane.f32.xlu0 %v74
    %v76 = vpop.xlane.xlu0 %75
    %v77 = vrcp.pop 16.0
    %v78 = vmul.f32 16.0, %v77
    %v79 = vsub.f32 1.0, %v78
    %v80 = vmul.f32 %v77, %v79
    %v81 = vadd.f32 %v77, %v80
    %vm82 = vweird.f32 %v77
    %v83 = vsel %vm82, %v77, %v81
    %v84 = vmul.f32 %v73, %v83
    %v85 = vmul.f32 %v76, %v83
    %v86 = vsub.f32 %v68, %v84
    %v87 = vsub.f32 %v69, %v85
    %v88 = vmul.f32 %v86, %v86
    %v89 = vmul.f32 %v87, %v87
    %v90 = vsel %vm70, %v88, 0.0
    %91 = vadd.xlane.f32.xlu0 %v90
    %v92 = vpop.xlane.xlu0 %91
    %v93 = vsel %vm70, %v89, 0.0
    %94 = vadd.xlane.f32.xlu0 %v93
    %v95 = vpop.xlane.xlu0 %94
    %v96 = vmul.f32 %v92, %v83
    %v97 = vmul.f32 %v95, %v83
    %v98 = vadd.f32 %v96, 1e-05
    %v99 = vadd.f32 %v97, 1e-05
    %v100 = vrsqrt.pop %v98
    %v101 = vmul.f32 %v100, %v98
    %v102 = vmul.f32 %v101, %v100
    %v103 = vmul.f32 0.5, %v102
    %v104 = vsub.f32 1.5, %v103
    %v105 = vmul.f32 %v100, %v104
    %vm106 = vweird.f32 %v98
    %vm107 = vweird.f32 %v100
    %vm108 = vmor %vm106, %vm107
    %v109 = vsel %vm108, %v100, %v105
    %v110 = vrsqrt.pop %v99
    %v111 = vmul.f32 %v110, %v99
    %v112 = vmul.f32 %v111, %v110
    %v113 = vmul.f32 0.5, %v112
    %v114 = vsub.f32 1.5, %v113
    %v115 = vmul.f32 %v110, %v114
    %vm116 = vweird.f32 %v99
    %vm117 = vweird.f32 %v110
    %vm118 = vmor %vm116, %vm117
    %v119 = vsel %vm118, %v110, %v115
    %v120 = vmul.f32 %v86, %v109
    %v121 = vmul.f32 %v87, %v119
    %v122 = vpack.c.bf16 %v121, %v120
    %v123 = vld [vmem:[#allocation4] sm:$0xf]
    %v124 = vld [vmem:[#allocation4 + $0x4] sm:$0xf]
    %v125 = vld [vmem:[%s2] sm:$0x1]
    %v127 = vperm.slane %v125, 0
    %v131 = vunpack.c.l.b16 %v123
    %v132 = vunpack.c.l.b16 %v124
    %v133 = vpack.c.b16 %v132, %v131
    %v136 = vsel %vm70, %v122, 0
    %138 = vmatpush.bf16.msra.mxu0 0
    %139 = vmatpush.bf16.msra.mxu0 0
    %140 = vmatpush.bf16.msra.mxu0 0
    %141 = vmatpush.bf16.msra.mxu0 0
    %142 = vmatpush.bf16.msra.mxu0 0
    %143 = vmatpush.bf16.msra.mxu0 0
    %144 = vmatpush.bf16.msra.mxu0 0
    %145 = vmatpush.bf16.msra.mxu0 %v133
    %146 = vmatmul.bf16.gmra.mxu0 %v136
    %v147 = vpop.f32.mrf.mxu0
    %v148 = vadd.f32 %v127, %v147
    %v149 = vpop.f32.mrf.mxu0
    %v150 = vadd.f32 %v127, %v149
    %151 = vdwg.mxu0
    %v152 = vmul.f32 %v148, 0.01
    %v153 = vmul.f32 %v150, 0.01
    %v154 = vmax.f32 %v148, %v152
    %v155 = vmax.f32 %v150, %v153
    %v156 = vpack.c.bf16 %v155, %v154
    %v157 = vld [vmem:[#allocation6] sm:$0xf]
    %v158 = vld [vmem:[#allocation6 + $0x4] sm:$0xf]
    %v159 = vld [vmem:[#allocation6 + $0x8] sm:$0xf]
    %v160 = vld [vmem:[#allocation6 + $0xc] sm:$0xf]
    %v161 = vld [vmem:[%s4] sm:$0x1]
    %v163 = vperm.slane %v161, 0
    %v169 = vunpack.c.l.b16 %v157
    %v170 = vunpack.c.l.b16 %v158
    %v171 = vunpack.c.l.b16 %v159
    %v172 = vunpack.c.l.b16 %v160
    %v173 = vpack.c.b16 %v170, %v169
    %v174 = vpack.c.b16 %v172, %v171
    %vm177 = vcmask 261120
    %v179 = vsel %vm177, %v156, 0
    %181 = vmatpush.bf16.msra.mxu0 0
    %182 = vmatpush.bf16.msra.mxu0 0
    %183 = vmatpush.bf16.msra.mxu0 0
    %184 = vmatpush.bf16.msra.mxu0 0
    %185 = vmatpush.bf16.msra.mxu0 0
    %186 = vmatpush.bf16.msra.mxu0 0
    %187 = vmatpush.bf16.msra.mxu0 %v174
    %188 = vmatpush.bf16.msra.mxu0 %v173
    %189 = vmatmul.bf16.gmra.mxu0 %v179
    %v190 = vpop.f32.mrf.mxu0
    %v191 = vadd.f32 %v163, %v190
    %v192 = vpop.f32.mrf.mxu0
    %v193 = vadd.f32 %v163, %v192
    %194 = vdwg.mxu0
    %195 = vst [vmem:[%s5] sm:$0xff] %v191
    %196 = vst [vmem:[%s5 + $0x8] sm:$0xff] %v193
    // Predicated region
    $region34: #{_mlp_forward_impl.1} parent=1 // pred_check
      _
    $region35: #{_mlp_forward_impl.1} parent=1 // pred_check_branch
      %198 = sbr.rel (0) target = $region37
    $region36: #{_mlp_forward_impl.1} parent=1 // pred_region
      _
    $region37: #{_mlp_forward_impl.1} parent=1 // pred_fallthru
      _
    // Predicated region
    $region38: #{_mlp_forward_impl.1} parent=1 // pred_check
      _
    $region39: #{_mlp_forward_impl.1} parent=1 // pred_check_branch
      %200 = sbr.rel (0) target = $region41
    $region40: #{_mlp_forward_impl.1} parent=1 // pred_region
      _
    $region41: #{_mlp_forward_impl.1} parent=1 // pred_fallthru
      _
    %201 = vsyncpa [#allocation3], 1
    %202 = vsyncpa [#allocation5], 1

</llo_original>
